<compile_context>
chip_gen: v7x
topology: tpu7x:2x2x1
jax: 0.10.0
libtpu: 0.0.40
codegen_flags: <defaults>
</compile_context>

<pallas_src>
import functools

import jax
import jax.numpy as jnp
from jax.experimental import pallas as pl
from jax.experimental.pallas import tpu as pltpu

SIGMA_DATA = 0.5


# ----------------------------------------------------------------------------
# Fused Pallas kernel: EDM scale + conditioned residual block + EDM combine
# ----------------------------------------------------------------------------
def _fused_edm_kernel(sigma_ref, x_ref, wcat_ref, cond_ref, w2t_ref, b2_ref,
                      o_ref):
    """One batch element, channel-major layout.

    x_ref:    (C, S)       noisy triplane, S = 3*R*R (lane dim, 128-multiple)
    wcat_ref: (H+Cout, Cin) == [w1.T ; wres.T]  (one MXU pass for both paths)
    cond_ref: (H, 1)       per-batch FiLM bias (cond + b1), column vector
    w2t_ref:  (Cout, H)
    b2_ref:   (Cout, 1)
    o_ref:    (Cout, S)    D_x = c_skip * x + c_out * F_x
    """
    b = pl.program_id(0)
    sigma = sigma_ref[b]
    denom = sigma * sigma + SIGMA_DATA * SIGMA_DATA
    c_in = jax.lax.rsqrt(denom)
    c_skip = (SIGMA_DATA * SIGMA_DATA) / denom
    c_out = sigma * SIGMA_DATA * c_in

    x = x_ref[...]                                              # (C, S)
    x_in = x * c_in                                             # EDM pre-scale

    hdim = cond_ref.shape[0]                                    # static

    # One MXU push covers both the hidden projection and the residual path.
    z = jnp.dot(wcat_ref[...], x_in,
                preferred_element_type=jnp.float32)             # (H+Cout, S)
    h_pre = z[:hdim, :] + cond_ref[...]                         # FiLM bias
    h = h_pre * jax.nn.sigmoid(h_pre)                           # SiLU
    f = (jnp.dot(w2t_ref[...], h, preferred_element_type=jnp.float32)
         + b2_ref[...] + z[hdim:, :])                           # (Cout, S)

    # EDM combine, stored lane-dense (last dim S = 768).
    o_ref[...] = c_skip * x + c_out * f


def _fused_forward(x_flat, sigma, wcat, cond_col, w2t, b2_col):
    B, C, S = x_flat.shape
    HC, Cin = wcat.shape
    Hd = cond_col.shape[1]
    Cout = b2_col.shape[0]
    return pl.pallas_call(
        _fused_edm_kernel,
        grid=(B,),
        in_specs=[
            pl.BlockSpec(memory_space=pltpu.SMEM),               # sigma (B,)
            pl.BlockSpec((None, C, S), lambda b: (b, 0, 0)),     # x
            pl.BlockSpec((HC, Cin), lambda b: (0, 0)),           # [w1.T; wres.T]
            pl.BlockSpec((None, Hd, 1), lambda b: (b, 0, 0)),    # cond + b1
            pl.BlockSpec((Cout, Hd), lambda b: (0, 0)),          # w2.T
            pl.BlockSpec((Cout, 1), lambda b: (0, 0)),           # b2
        ],
        out_specs=pl.BlockSpec((None, Cout, S), lambda b: (b, 0, 0)),
        out_shape=jax.ShapeDtypeStruct((B, Cout, S), jnp.float32),
        compiler_params=pltpu.CompilerParams(
            dimension_semantics=("parallel",)),                  # v7x: 2 TCs
    )(sigma, x_flat, wcat, cond_col, w2t, b2_col)


# ----------------------------------------------------------------------------
# Glue: conditioning from c_noise / image / valid_frames / category_code
# ----------------------------------------------------------------------------
def _silu(x):
    return x * jax.nn.sigmoid(x)


def _compute_cond(c_noise, image_emb, valid_frames, category_code, params):
    # time embedding MLP on c_noise (= log(sigma)/4)
    t = c_noise[:, None]                                            # (B, 1)
    temb = _silu(t @ params["wt1"] + params["bt1"])
    temb = temb @ params["wt2"] + params["bt2"]                     # (B, H)
    # image conditioning: mean over tokens, valid_frames-weighted mean of views
    w = valid_frames / jnp.clip(valid_frames.sum(-1, keepdims=True), 1.0, None)
    img_pool = jnp.einsum("bvd,bv->bd", image_emb.mean(axis=2), w)  # (B, Dimg)
    iemb = img_pool @ params["wi"] + params["bi"]                   # (B, H)
    # category conditioning
    cemb = category_code @ params["wc"] + params["bc"]              # (B, H)
    return temb + iemb + cemb


# ----------------------------------------------------------------------------
# Module-equivalent forward
# ----------------------------------------------------------------------------
def triplane_diff_edm_forward(params, x, sigma, image_emb, proj_mat,
                              valid_frames, category_code):
    """EDM-preconditioned forward, matching Triplane_Diff_MultiImgCond_EDM."""
    del proj_mat  # TODO(synk): proj_mat-driven projection attention (see top)
    x = x.astype(jnp.float32)
    B, C, H3, W = x.shape
    S = H3 * W
    sigma = sigma.astype(jnp.float32).reshape(-1)                   # (B,)

    # c_noise = log(sigma) / 4, conditioning vector (small, plain JAX glue)
    c_noise = jnp.log(sigma) / 4.0
    cond = _compute_cond(c_noise, image_emb, valid_frames, category_code,
                         params)                                     # (B, H)

    # Fold b1 into cond; pre-transpose / concat weights once (tiny, host-side).
    cond_col = (cond + params["b1"])[:, :, None]                    # (B, H, 1)
    wcat = jnp.concatenate([params["w1"].T, params["wres"].T], axis=0)
    w2t = params["w2"].T                                            # (Cout, H)
    b2_col = params["b2"].reshape(-1, 1)                            # (Cout, 1)

    x_flat = x.reshape(B, C, S)
    d_flat = _fused_forward(x_flat, sigma, wcat, cond_col, w2t, b2_col)
    return d_flat.reshape(B, C, H3, W)


# ----------------------------------------------------------------------------
# Pure-JAX reference (same math, no Pallas) for a correctness check
# ----------------------------------------------------------------------------
def _reference_forward(params, x, sigma, image_emb, proj_mat, valid_frames,
                       category_code):
    del proj_mat
    x = x.astype(jnp.float32)
    B, C, H3, W = x.shape
    S = H3 * W
    sigma = sigma.astype(jnp.float32).reshape(-1)
    s = sigma.reshape(-1, 1, 1, 1)
    c_skip = SIGMA_DATA ** 2 / (s ** 2 + SIGMA_DATA ** 2)
    c_out = s * SIGMA_DATA / jnp.sqrt(s ** 2 + SIGMA_DATA ** 2)
    c_in = 1.0 / jnp.sqrt(SIGMA_DATA ** 2 + s ** 2)
    c_noise = jnp.log(sigma) / 4.0
    cond = _compute_cond(c_noise, image_emb, valid_frames, category_code,
                         params)
    x_in = (c_in * x).reshape(B, C, S).transpose(0, 2, 1)           # (B, S, C)
    h = _silu(x_in @ params["w1"] + params["b1"] + cond[:, None, :])
    f = h @ params["w2"] + params["b2"] + x_in @ params["wres"]
    F_x = f.transpose(0, 2, 1).reshape(B, C, H3, W)
    return c_skip * x + c_out * F_x


# ----------------------------------------------------------------------------
# Deterministic parameter init
# ----------------------------------------------------------------------------
def init_params(key, c_in, c_out, hidden, d_img, d_cat):
    ks = jax.random.split(key, 8)
    n = lambda k, shape: (0.1 * jax.random.normal(k, shape)).astype(jnp.float32)
    return {
        # main residual block (Pallas hot path)
        "w1": n(ks[0], (c_in, hidden)),
        "b1": jnp.zeros((1, hidden), jnp.float32),
        "w2": n(ks[1], (hidden, c_out)),
        "b2": jnp.zeros((1, c_out), jnp.float32),
        "wres": n(ks[2], (c_in, c_out)),
        # time-embedding MLP
        "wt1": n(ks[3], (1, hidden)),
        "bt1": jnp.zeros((hidden,), jnp.float32),
        "wt2": n(ks[4], (hidden, hidden)),
        "bt2": jnp.zeros((hidden,), jnp.float32),
        # image / category conditioning projections
        "wi": n(ks[5], (d_img, hidden)),
        "bi": jnp.zeros((hidden,), jnp.float32),
        "wc": n(ks[6], (d_cat, hidden)),
        "bc": jnp.zeros((hidden,), jnp.float32),
    }


# ----------------------------------------------------------------------------
if __name__ == "__main__":
    # small shapes consistent with the module:
    #   diff_reso R = 16, diff_dim (output_channel) C = 8, x: (B, C, 3R, R)
    B, C, R = 2, 8, 16
    H3, W = 3 * R, R
    V, T, D_IMG = 2, 16, 32      # num views, ViT tokens, img_in_channels
    D_CAT = 16                   # category code dim
    HIDDEN = 32

    key = jax.random.PRNGKey(0)
    k_x, k_s, k_img, k_proj, k_cat, k_p = jax.random.split(key, 6)

    x = jax.random.normal(k_x, (B, C, H3, W), jnp.float32)
    sigma = jax.random.uniform(k_s, (B,), jnp.float32, 0.5, 3.0)
    image_emb = jax.random.normal(k_img, (B, V, T, D_IMG), jnp.float32)
    proj_mat = jax.random.normal(k_proj, (B, V, 4, 4), jnp.float32)
    valid_frames = jnp.array([[1.0, 1.0], [1.0, 0.0]], jnp.float32)
    category_code = jax.random.normal(k_cat, (B, D_CAT), jnp.float32)

    params = init_params(k_p, C, C, HIDDEN, D_IMG, D_CAT)

    fwd = jax.jit(functools.partial(triplane_diff_edm_forward, params))
    d_x = fwd(x, sigma, image_emb, proj_mat, valid_frames, category_code)
    d_x = jax.block_until_ready(d_x)

    # correctness check against pure-JAX reference of the same math
    d_ref = _reference_forward(params, x, sigma, image_emb, proj_mat,
                               valid_frames, category_code)
    assert d_x.shape == (B, C, H3, W) and d_x.dtype == jnp.float32
    assert jnp.allclose(d_x, d_ref, atol=1e-4, rtol=1e-4), (
        float(jnp.max(jnp.abs(d_x - d_ref))))

    print("KERNEL_OK")
</pallas_src>

<mosaic_0001>
module attributes {stable_mosaic.version = 11 : i64} {
  func.func @_fused_edm_kernel(%arg0: i32, %arg1: memref<2xf32, #tpu.memory_space<smem>>, %arg2: memref<1x8x768xf32, #tpu.memory_space<vmem>>, %arg3: memref<40x8xf32, #tpu.memory_space<vmem>>, %arg4: memref<1x32x1xf32, #tpu.memory_space<vmem>>, %arg5: memref<8x32xf32, #tpu.memory_space<vmem>>, %arg6: memref<8x1xf32, #tpu.memory_space<vmem>>, %arg7: memref<1x8x768xf32, #tpu.memory_space<vmem>>) attributes {dimension_semantics = [#tpu.dimension_semantics<parallel>], iteration_bounds = array<i64: 2>, scalar_prefetch = 0 : i64, scratch_operands = 0 : i64, tpu.core_type = #tpu.core_type<tc>, window_params = [{transform_indices = @transform_0, window_bounds = array<i64: 2>}, {transform_indices = @transform_1, window_bounds = array<i64: 1, 8, 768>}, {pipeline_mode = #tpu.pipeline_mode<synchronous>, transform_indices = @transform_2, window_bounds = array<i64: 40, 8>}, {transform_indices = @transform_3, window_bounds = array<i64: 1, 32, 1>}, {pipeline_mode = #tpu.pipeline_mode<synchronous>, transform_indices = @transform_4, window_bounds = array<i64: 8, 32>}, {pipeline_mode = #tpu.pipeline_mode<synchronous>, transform_indices = @transform_5, window_bounds = array<i64: 8, 1>}, {transform_indices = @transform_6, window_bounds = array<i64: 1, 8, 768>}]} {
    %0 = arith.index_cast %arg0 : i32 to index
    %1 = memref.load %arg1[%0] : memref<2xf32, #tpu.memory_space<smem>>
    %2 = arith.mulf %1, %1 : f32
    %cst = arith.constant 2.500000e-01 : f32
    %3 = arith.addf %2, %cst : f32
    %4 = math.rsqrt %3 : f32
    %cst_0 = arith.constant 2.500000e-01 : f32
    %5 = arith.divf %cst_0, %3 : f32
    %cst_1 = arith.constant 5.000000e-01 : f32
    %6 = arith.mulf %1, %cst_1 : f32
    %7 = arith.mulf %6, %4 : f32
    %c0 = arith.constant 0 : index
    %c0_2 = arith.constant 0 : index
    %c0_3 = arith.constant 0 : index
    %8 = vector.load %arg2[%c0, %c0_2, %c0_3] : memref<1x8x768xf32, #tpu.memory_space<vmem>>, vector<1x8x768xf32>
    %9 = vector.shape_cast %8 : vector<1x8x768xf32> to vector<8x768xf32>
    %10 = vector.broadcast %4 : f32 to vector<8x768xf32>
    %11 = arith.mulf %9, %10 : vector<8x768xf32>
    %c0_4 = arith.constant 0 : index
    %c0_5 = arith.constant 0 : index
    %12 = vector.load %arg3[%c0_4, %c0_5] : memref<40x8xf32, #tpu.memory_space<vmem>>, vector<40x8xf32>
    %cst_6 = arith.constant dense<0.000000e+00> : vector<40x768xf32>
    %13 = tpu.matmul %12, %11, %cst_6 {dimension_numbers = #tpu.dot_dimension_numbers<[1], [0], [0], [1], [0, 0, 1, 1], [], []>} : vector<40x8xf32>, vector<8x768xf32>, vector<40x768xf32> -> vector<40x768xf32>
    %14 = vector.extract_strided_slice %13 {offsets = [0, 0], sizes = [32, 768], strides = [1, 1]} : vector<40x768xf32> to vector<32x768xf32>
    %c0_7 = arith.constant 0 : index
    %c0_8 = arith.constant 0 : index
    %c0_9 = arith.constant 0 : index
    %15 = vector.load %arg4[%c0_7, %c0_8, %c0_9] : memref<1x32x1xf32, #tpu.memory_space<vmem>>, vector<1x32x1xf32>
    %16 = vector.shape_cast %15 : vector<1x32x1xf32> to vector<32x1xf32>
    %17 = vector.broadcast %16 : vector<32x1xf32> to vector<32x768xf32>
    %18 = arith.addf %14, %17 : vector<32x768xf32>
    %19 = arith.negf %18 : vector<32x768xf32>
    %20 = math.exp %19 : vector<32x768xf32>
    %cst_10 = arith.constant 1.000000e+00 : f32
    %21 = vector.broadcast %cst_10 : f32 to vector<32x768xf32>
    %22 = arith.addf %21, %20 : vector<32x768xf32>
    %23 = arith.divf %21, %22 : vector<32x768xf32>
    %24 = arith.mulf %18, %23 : vector<32x768xf32>
    %c0_11 = arith.constant 0 : index
    %c0_12 = arith.constant 0 : index
    %25 = vector.load %arg5[%c0_11, %c0_12] : memref<8x32xf32, #tpu.memory_space<vmem>>, vector<8x32xf32>
    %cst_13 = arith.constant dense<0.000000e+00> : vector<8x768xf32>
    %26 = tpu.matmul %25, %24, %cst_13 {dimension_numbers = #tpu.dot_dimension_numbers<[1], [0], [0], [1], [0, 0, 1, 1], [], []>} : vector<8x32xf32>, vector<32x768xf32>, vector<8x768xf32> -> vector<8x768xf32>
    %c0_14 = arith.constant 0 : index
    %c0_15 = arith.constant 0 : index
    %27 = vector.load %arg6[%c0_14, %c0_15] : memref<8x1xf32, #tpu.memory_space<vmem>>, vector<8x1xf32>
    %28 = vector.broadcast %27 : vector<8x1xf32> to vector<8x768xf32>
    %29 = arith.addf %26, %28 : vector<8x768xf32>
    %30 = vector.extract_strided_slice %13 {offsets = [32, 0], sizes = [8, 768], strides = [1, 1]} : vector<40x768xf32> to vector<8x768xf32>
    %31 = arith.addf %29, %30 : vector<8x768xf32>
    %32 = vector.broadcast %5 : f32 to vector<8x768xf32>
    %33 = arith.mulf %32, %9 : vector<8x768xf32>
    %34 = vector.broadcast %7 : f32 to vector<8x768xf32>
    %35 = arith.mulf %34, %31 : vector<8x768xf32>
    %36 = arith.addf %33, %35 : vector<8x768xf32>
    %c0_16 = arith.constant 0 : index
    %c0_17 = arith.constant 0 : index
    %c0_18 = arith.constant 0 : index
    %37 = vector.load %arg7[%c0_16, %c0_17, %c0_18] : memref<1x8x768xf32, #tpu.memory_space<vmem>>, vector<1x8x768xf32>
    %38 = vector.shape_cast %37 : vector<1x8x768xf32> to vector<8x768xf32>
    %39 = vector.shape_cast %36 : vector<8x768xf32> to vector<1x8x768xf32>
    tpu.vector_store %arg7[%c0_16, %c0_17, %c0_18], %39 {strides = array<i32>} : memref<1x8x768xf32, #tpu.memory_space<vmem>>, vector<1x8x768xf32>,
    return
  }
  func.func @transform_0(%arg0: i32) -> i32 {
    %c0_i32 = arith.constant 0 : i32
    %c0_i32_0 = arith.constant 0 : i32
    return %c0_i32 : i32
  }
  func.func @transform_1(%arg0: i32) -> (i32, i32, i32) {
    %c0_i32 = arith.constant 0 : i32
    %c0_i32_0 = arith.constant 0 : i32
    %c0_i32_1 = arith.constant 0 : i32
    return %arg0, %c0_i32, %c0_i32_0 : i32, i32, i32
  }
  func.func @transform_2(%arg0: i32) -> (i32, i32) {
    %c0_i32 = arith.constant 0 : i32
    %c0_i32_0 = arith.constant 0 : i32
    %c0_i32_1 = arith.constant 0 : i32
    return %c0_i32, %c0_i32_0 : i32, i32
  }
  func.func @transform_3(%arg0: i32) -> (i32, i32, i32) {
    %c0_i32 = arith.constant 0 : i32
    %c0_i32_0 = arith.constant 0 : i32
    %c0_i32_1 = arith.constant 0 : i32
    return %arg0, %c0_i32, %c0_i32_0 : i32, i32, i32
  }
  func.func @transform_4(%arg0: i32) -> (i32, i32) {
    %c0_i32 = arith.constant 0 : i32
    %c0_i32_0 = arith.constant 0 : i32
    %c0_i32_1 = arith.constant 0 : i32
    return %c0_i32, %c0_i32_0 : i32, i32
  }
  func.func @transform_5(%arg0: i32) -> (i32, i32) {
    %c0_i32 = arith.constant 0 : i32
    %c0_i32_0 = arith.constant 0 : i32
    %c0_i32_1 = arith.constant 0 : i32
    return %c0_i32, %c0_i32_0 : i32, i32
  }
  func.func @transform_6(%arg0: i32) -> (i32, i32, i32) {
    %c0_i32 = arith.constant 0 : i32
    %c0_i32_0 = arith.constant 0 : i32
    %c0_i32_1 = arith.constant 0 : i32
    return %arg0, %c0_i32, %c0_i32_0 : i32, i32, i32
  }
}

</mosaic_0001>

<llo_original>
// kernel: triplane_diff_edm_forward.1
$region0: #{triplane_diff_edm_forward.1}
  #allocation0 [shape = 'u32[]', space=smem, size = 0x4, offset = 0x4, fixed_abs, tag = 'smem constant byte address 0x4 - core index']
  #allocation1 [shape = 'u32[144,128]{1,0:T(1,128)}', space=vmem, size = 0x12000, scoped, tag = 'internal scratch']
  %s0 = inlined_call_operand.vmem [shape: f32[2], index: 0, kind: input, shape index: {}]
  %s1 = inlined_call_operand.vmem [shape: f32[2,8,768], index: 1, kind: input, shape index: {}]
  %s2 = inlined_call_operand.vmem [shape: f32[40,8], index: 2, kind: input, shape index: {}]
  %s3 = inlined_call_operand.vmem [shape: f32[2,32,1], index: 3, kind: input, shape index: {}]
  %s4 = inlined_call_operand.vmem [shape: f32[8,32], index: 4, kind: input, shape index: {}]
  %s5 = inlined_call_operand.vmem [shape: f32[8,1], index: 5, kind: input, shape index: {}]
  %s6 = inlined_call_operand.vmem [shape: f32[2,8,768], index: 6, kind: output, shape index: {}]
  %s7 = sld [smem:[#allocation0]]
  $region61: #{triplane_diff_edm_forward.1} parent=0
    _
  %s9 = ssub.s32 1, %s7
  %s10 = scalar_select 0, %s9, %s7
  $region1: #{triplane_diff_edm_forward.1} parent=0
    #allocation2 [shape = 'u8[512]{0}', space=smem, size = 0x200, scoped, tag = 'input window, operand 0, single buffered']
    #allocation3 [shape = 's32[2]{0}', space=sflag, size = 0x8, scoped, tag = 'scoped memory for triplane_diff_edm_forward.1']
    %11 = vsyncpa [#allocation3], 0
    loop: start=0, step=1, limit=4
    $region2: #{triplane_diff_edm_forward.1} parent=1 // loop_pre_header
      _
    $region3: #{triplane_diff_edm_forward.1} parent=1 // loop_header
      %s13 = sphi 0, %s17
      %p14 = scmp.ge.s32.totalorder %s13, 4
      %s21 = sphi 0, %s21
      %s23 = sphi 0, %s21
      %s24 = sphi 0, %s23
      %s38 = sphi 0, %s24
      %s44 = sphi 0, %s46
      %s47 = sphi 0, %s44
      %s48 = sphi 0, %s47
      %s64 = sphi 0, %s48
      %s68 = sphi 0, %s68
      %s70 = sphi 0, %s68
      %s71 = sphi 0, %s70
      %s85 = sphi 0, %s71
      %s91 = sphi 0, %s93
      %s94 = sphi 0, %s91
      %s95 = sphi 0, %s94
      %s111 = sphi 0, %s95
      %s115 = sphi 0, %s115
      %s117 = sphi 0, %s115
      %s118 = sphi 0, %s117
      %s132 = sphi 0, %s118
      %s136 = sphi 0, %s136
      %s138 = sphi 0, %s136
      %s139 = sphi 0, %s138
      %s153 = sphi 0, %s139
      %s159 = sphi 0, %s161
      %s162 = sphi 0, %s159
      %s163 = sphi 0, %s162
      %s179 = sphi 0, %s163
    $region4: #{triplane_diff_edm_forward.1} parent=1 // loop_header_branch
      %16 = sbr.rel (%p14) target = $region8
    $region5: #{triplane_diff_edm_forward.1} parent=1 // loop_body
      %s18 = ssub.s32 %s13, 1
      %s19 = ssub.s32 %s13, 2
      %s20 = sadd.s32 %s13, 1
      %s22 = sadd.s32 %s21, 1
      %p25 = scmp.eq.s32.totalorder %s13, 1
      %p26 = scmp.ne.s32.totalorder %s21, %s23
      %p27 = scmp.eq.s32.totalorder %s13, 0
      %p28 = por %p26, %p27
      %p29 = scmp.ne.s32.totalorder %s21, %s23
      %p30 = scmp.eq.s32.totalorder %s18, 1
      %p31 = por %p29, %p30
      %p32 = scmp.ne.s32.totalorder %s23, %s24
      %p33 = scmp.eq.s32.totalorder %s18, 0
      %p34 = por %p32, %p33
      %p35 = scmp.ne.s32.totalorder %s23, %s24
      %p36 = scmp.eq.s32.totalorder %s19, 1
      %p37 = por %p35, %p36
      %p39 = scmp.ne.s32.totalorder %s24, %s38
      %p40 = scmp.eq.s32.totalorder %s19, 0
      %p41 = por %p39, %p40
      %s42 = ssub.s32 %s13, %s20
      %p43 = scmp.eq.s32.totalorder %s42, 0
      %s45 = sadd.s32 %s44, 1
      %s46 = scalar_select %p43, %s44, %s45
      %p49 = pneg %p43
      %p50 = scmp.eq.s32.totalorder %s13, 1
      %p51 = por %p49, %p50
      %p52 = scmp.ne.s32.totalorder %s44, %s47
      %p53 = scmp.eq.s32.totalorder %s13, 0
      %p54 = por %p52, %p53
      %p55 = scmp.ne.s32.totalorder %s44, %s47
      %p56 = scmp.eq.s32.totalorder %s18, 1
      %p57 = por %p55, %p56
      %p58 = scmp.ne.s32.totalorder %s47, %s48
      %p59 = scmp.eq.s32.totalorder %s18, 0
      %p60 = por %p58, %p59
      %p61 = scmp.ne.s32.totalorder %s47, %s48
      %p62 = scmp.eq.s32.totalorder %s19, 1
      %p63 = por %p61, %p62
      %p65 = scmp.ne.s32.totalorder %s48, %s64
      %p66 = scmp.eq.s32.totalorder %s19, 0
      %p67 = por %p65, %p66
      %s69 = sadd.s32 %s68, 1
      %p72 = scmp.eq.s32.totalorder %s13, 1
      %p73 = scmp.ne.s32.totalorder %s68, %s70
      %p74 = scmp.eq.s32.totalorder %s13, 0
      %p75 = por %p73, %p74
      %p76 = scmp.ne.s32.totalorder %s68, %s70
      %p77 = scmp.eq.s32.totalorder %s18, 1
      %p78 = por %p76, %p77
      %p79 = scmp.ne.s32.totalorder %s70, %s71
      %p80 = scmp.eq.s32.totalorder %s18, 0
      %p81 = por %p79, %p80
      %p82 = scmp.ne.s32.totalorder %s70, %s71
      %p83 = scmp.eq.s32.totalorder %s19, 1
      %p84 = por %p82, %p83
      %p86 = scmp.ne.s32.totalorder %s71, %s85
      %p87 = scmp.eq.s32.totalorder %s19, 0
      %p88 = por %p86, %p87
      %s89 = ssub.s32 %s13, %s20
      %p90 = scmp.eq.s32.totalorder %s89, 0
      %s92 = sadd.s32 %s91, 1
      %s93 = scalar_select %p90, %s91, %s92
      %p96 = pneg %p90
      %p97 = scmp.eq.s32.totalorder %s13, 1
      %p98 = por %p96, %p97
      %p99 = scmp.ne.s32.totalorder %s91, %s94
      %p100 = scmp.eq.s32.totalorder %s13, 0
      %p101 = por %p99, %p100
      %p102 = scmp.ne.s32.totalorder %s91, %s94
      %p103 = scmp.eq.s32.totalorder %s18, 1
      %p104 = por %p102, %p103
      %p105 = scmp.ne.s32.totalorder %s94, %s95
      %p106 = scmp.eq.s32.totalorder %s18, 0
      %p107 = por %p105, %p106
      %p108 = scmp.ne.s32.totalorder %s94, %s95
      %p109 = scmp.eq.s32.totalorder %s19, 1
      %p110 = por %p108, %p109
      %p112 = scmp.ne.s32.totalorder %s95, %s111
      %p113 = scmp.eq.s32.totalorder %s19, 0
      %p114 = por %p112, %p113
      %s116 = sadd.s32 %s115, 1
      %p119 = scmp.eq.s32.totalorder %s13, 1
      %p120 = scmp.ne.s32.totalorder %s115, %s117
      %p121 = scmp.eq.s32.totalorder %s13, 0
      %p122 = por %p120, %p121
      %p123 = scmp.ne.s32.totalorder %s115, %s117
      %p124 = scmp.eq.s32.totalorder %s18, 1
      %p125 = por %p123, %p124
      %p126 = scmp.ne.s32.totalorder %s117, %s118
      %p127 = scmp.eq.s32.totalorder %s18, 0
      %p128 = por %p126, %p127
      %p129 = scmp.ne.s32.totalorder %s117, %s118
      %p130 = scmp.eq.s32.totalorder %s19, 1
      %p131 = por %p129, %p130
      %p133 = scmp.ne.s32.totalorder %s118, %s132
      %p134 = scmp.eq.s32.totalorder %s19, 0
      %p135 = por %p133, %p134
      %s137 = sadd.s32 %s136, 1
      %p140 = scmp.eq.s32.totalorder %s13, 1
      %p141 = scmp.ne.s32.totalorder %s136, %s138
      %p142 = scmp.eq.s32.totalorder %s13, 0
      %p143 = por %p141, %p142
      %p144 = scmp.ne.s32.totalorder %s136, %s138
      %p145 = scmp.eq.s32.totalorder %s18, 1
      %p146 = por %p144, %p145
      %p147 = scmp.ne.s32.totalorder %s138, %s139
      %p148 = scmp.eq.s32.totalorder %s18, 0
      %p149 = por %p147, %p148
      %p150 = scmp.ne.s32.totalorder %s138, %s139
      %p151 = scmp.eq.s32.totalorder %s19, 1
      %p152 = por %p150, %p151
      %p154 = scmp.ne.s32.totalorder %s139, %s153
      %p155 = scmp.eq.s32.totalorder %s19, 0
      %p156 = por %p154, %p155
      %s157 = ssub.s32 %s13, %s20
      %p158 = scmp.eq.s32.totalorder %s157, 0
      %s160 = sadd.s32 %s159, 1
      %s161 = scalar_select %p158, %s159, %s160
      %p164 = pneg %p158
      %p165 = scmp.eq.s32.totalorder %s13, 1
      %p166 = por %p164, %p165
      %p167 = scmp.ne.s32.totalorder %s159, %s162
      %p168 = scmp.eq.s32.totalorder %s13, 0
      %p169 = por %p167, %p168
      %p170 = scmp.ne.s32.totalorder %s159, %s162
      %p171 = scmp.eq.s32.totalorder %s18, 1
      %p172 = por %p170, %p171
      %p173 = scmp.ne.s32.totalorder %s162, %s163
      %p174 = scmp.eq.s32.totalorder %s18, 0
      %p175 = por %p173, %p174
      %p176 = scmp.ne.s32.totalorder %s162, %s163
      %p177 = scmp.eq.s32.totalorder %s19, 1
      %p178 = por %p176, %p177
      %p180 = scmp.ne.s32.totalorder %s163, %s179
      %p181 = scmp.eq.s32.totalorder %s19, 0
      %p182 = por %p180, %p181
      %p183 = scmp.le.s32.totalorder 1, %s13
      %p184 = scmp.lt.s32.totalorder %s13, 3
      %p185 = pnand %p183, %p184
      %p186 = pneg %p185
      // Predicated region
      $region9: #{triplane_diff_edm_forward.1} parent=5 // pred_check
        _
      $region10: #{triplane_diff_edm_forward.1} parent=5 // pred_check_branch
        %188 = sbr.rel (%p185) target = $region12
      $region11: #{triplane_diff_edm_forward.1} parent=5 // pred_region
        %s189 = ssub.s32 %s13, 1
        // Predicated region
        $region13: #{triplane_diff_edm_forward.1} parent=11 // pred_check
          %p190 = pneg %p34
        $region14: #{triplane_diff_edm_forward.1} parent=11 // pred_check_branch
          %192 = sbr.rel (%p190) target = $region16
        $region15: #{triplane_diff_edm_forward.1} parent=11 // pred_region
          %s194 = ssub.s32 16, 16
          %195 = vsyncadd [#allocation3], %s194
          %s197 = sshll.u32 %s0, 4
          %s198 = int_to_ptr.vmem [resolvable:$true] %s197
          %200 = dma.vmem_to_smem %s198, 16, [#allocation2], [#allocation3]
        $region16: #{triplane_diff_edm_forward.1} parent=11 // pred_fallthru
          _
        // Predicated region
        $region17: #{triplane_diff_edm_forward.1} parent=11 // pred_check
          %p201 = pneg %p81
        $region18: #{triplane_diff_edm_forward.1} parent=11 // pred_check_branch
          %203 = sbr.rel (%p201) target = $region20
        $region19: #{triplane_diff_edm_forward.1} parent=11 // pred_region
          _
        $region20: #{triplane_diff_edm_forward.1} parent=11 // pred_fallthru
          _
        // Predicated region
        $region21: #{triplane_diff_edm_forward.1} parent=11 // pred_check
          %p204 = pneg %p128
        $region22: #{triplane_diff_edm_forward.1} parent=11 // pred_check_branch
          %206 = sbr.rel (%p204) target = $region24
        $region23: #{triplane_diff_edm_forward.1} parent=11 // pred_region
          _
        $region24: #{triplane_diff_edm_forward.1} parent=11 // pred_fallthru
          _
        // Predicated region
        $region25: #{triplane_diff_edm_forward.1} parent=11 // pred_check
          %p207 = pneg %p149
        $region26: #{triplane_diff_edm_forward.1} parent=11 // pred_check_branch
          %209 = sbr.rel (%p207) target = $region28
        $region27: #{triplane_diff_edm_forward.1} parent=11 // pred_region
          _
        $region28: #{triplane_diff_edm_forward.1} parent=11 // pred_fallthru
          _
      $region12: #{triplane_diff_edm_forward.1} parent=5 // pred_fallthru
        _
      %p210 = scmp.lt.s32.totalorder %s13, 2
      // Predicated region
      $region29: #{triplane_diff_edm_forward.1} parent=5 // pred_check
        %p211 = pneg %p210
      $region30: #{triplane_diff_edm_forward.1} parent=5 // pred_check_branch
        %213 = sbr.rel (%p211) target = $region32
      $region31: #{triplane_diff_edm_forward.1} parent=5 // pred_region
        // Predicated region
        $region33: #{triplane_diff_edm_forward.1} parent=31 // pred_check
          %p214 = pneg %p54
        $region34: #{triplane_diff_edm_forward.1} parent=31 // pred_check_branch
          %216 = sbr.rel (%p214) target = $region36
        $region35: #{triplane_diff_edm_forward.1} parent=31 // pred_region
          %p217 = scmp.lt.s32.totalorder %s13, 1
          %s218 = scalar_select %p217, %s13, 1
          %s219 = smul.addr %s218, 6
          %s220 = smul.addr %s219, 8
          %s221 = scalar_lea.vmem %s1, %s220
        $region36: #{triplane_diff_edm_forward.1} parent=31 // pred_fallthru
          _
        // Predicated region
        $region37: #{triplane_diff_edm_forward.1} parent=31 // pred_check
          %p222 = pneg %p101
        $region38: #{triplane_diff_edm_forward.1} parent=31 // pred_check_branch
          %224 = sbr.rel (%p222) target = $region40
        $region39: #{triplane_diff_edm_forward.1} parent=31 // pred_region
          %p225 = scmp.lt.s32.totalorder %s13, 1
          %s226 = scalar_select %p225, %s13, 1
          %s227 = smul.addr %s226, 4
          %s228 = smul.addr %s227, 8
          %s229 = scalar_lea.vmem %s3, %s228
        $region40: #{triplane_diff_edm_forward.1} parent=31 // pred_fallthru
          _
      $region32: #{triplane_diff_edm_forward.1} parent=5 // pred_fallthru
        _
      %p230 = scmp.le.s32.totalorder 1, %s13
      %p231 = scmp.lt.s32.totalorder %s13, 3
      %p232 = pnand %p230, %p231
      %p233 = pneg %p232
      // Predicated region
      $region41: #{triplane_diff_edm_forward.1} parent=5 // pred_check
        _
      $region42: #{triplane_diff_edm_forward.1} parent=5 // pred_check_branch
        %235 = sbr.rel (%p232) target = $region44
      $region43: #{triplane_diff_edm_forward.1} parent=5 // pred_region
        %s236 = ssub.s32 %s13, 1
        // Predicated region
        $region45: #{triplane_diff_edm_forward.1} parent=43 // pred_check
          %p237 = pneg %p34
        $region46: #{triplane_diff_edm_forward.1} parent=43 // pred_check_branch
          %239 = sbr.rel (%p237) target = $region48
        $region47: #{triplane_diff_edm_forward.1} parent=43 // pred_region
          %240 = dma.done [#allocation3], 16
        $region48: #{triplane_diff_edm_forward.1} parent=43 // pred_fallthru
          _
        %241 = sfence
        %p242 = pneg %p34
        %p243 = pneg %p31
        %p244 = scmp.lt.s32.totalorder %s18, 1
        %s245 = scalar_select %p244, %s18, 1
        %s246 = smul.addr %s245, 6
        %s247 = smul.addr %s246, 8
        %s248 = scalar_lea.vmem %s1, %s247
        %p249 = pneg %p60
        %p250 = pneg %p57
        %p251 = pneg %p81
        %p252 = pneg %p78
        %p253 = scmp.lt.s32.totalorder %s18, 1
        %s254 = scalar_select %p253, %s18, 1
        %s255 = smul.addr %s254, 4
        %s256 = smul.addr %s255, 8
        %s257 = scalar_lea.vmem %s3, %s256
        %p258 = pneg %p107
        %p259 = pneg %p104
        %p260 = pneg %p128
        %p261 = pneg %p125
        %p262 = pneg %p149
        %p263 = pneg %p146
        %p264 = pneg %p175
        %p265 = pneg %p172
        %p266 = scmp.lt.s32.totalorder %s18, 1
        %s267 = scalar_select %p266, %s18, 1
        %s268 = smul.addr %s267, 6
        %s269 = smul.addr %s268, 8
        %s270 = scalar_lea.vmem %s6, %s269
        %p271 = scmp.lt.s32.totalorder %s18, 1
        %s272 = scalar_select %p271, %s18, 1
        %s273 = smul.addr %s272, 6
        %s274 = smul.addr %s273, 8
        %s275 = scalar_lea.vmem %s1, %s274
        %p276 = scmp.lt.s32.totalorder %s18, 1
        %s277 = scalar_select %p276, %s18, 1
        %s278 = smul.addr %s277, 4
        %s279 = smul.addr %s278, 8
        %s280 = scalar_lea.vmem %s3, %s279
        %p281 = scmp.lt.s32.totalorder %s18, 1
        %s282 = scalar_select %p281, %s18, 1
        %s283 = smul.addr %s282, 6
        %s284 = smul.addr %s283, 8
        %s285 = scalar_lea.vmem %s6, %s284
        %s286 = sld [smem:[#allocation2 + %s18]]
        %s287 = smul.f32 %s286, %s286
        %s288 = sadd.f32 %s287, 0.25
        %v289 = vstv %s288
        %v290 = vrsqrt.pop %v289
        %s291 = vtos %v290
        %v292 = vstv %s288
        %v293 = vrcp.pop %v292
        %s294 = vtos %v293
        %s295 = smul.f32 0.25, %s294
        %s296 = smul.f32 %s286, 0.5
        %s297 = smul.f32 %s296, %s291
        %v298 = vld [vmem:[%s275] sm:$0xff]
        %v299 = vld [vmem:[%s275 + $0x8] sm:$0xff]
        %v300 = vld [vmem:[%s275 + $0x10] sm:$0xff]
        %v301 = vld [vmem:[%s275 + $0x18] sm:$0xff]
        %v302 = vld [vmem:[%s275 + $0x20] sm:$0xff]
        %v303 = vld [vmem:[%s275 + $0x28] sm:$0xff]
        %v304 = vstv %s291
        %v305 = vmul.f32 %v298, %v304
        %v306 = vmul.f32 %v299, %v304
        %v307 = vmul.f32 %v300, %v304
        %v308 = vmul.f32 %v301, %v304
        %v309 = vmul.f32 %v302, %v304
        %v310 = vmul.f32 %v303, %v304
        %v311 = vld [vmem:[%s2] sm:$0xff]
        %v312 = vld [vmem:[%s2 + $0x8] sm:$0xff]
        %v313 = vld [vmem:[%s2 + $0x10] sm:$0xff]
        %v314 = vld [vmem:[%s2 + $0x18] sm:$0xff]
        %v315 = vld [vmem:[%s2 + $0x20] sm:$0xff]
        %vm316 = vcmask 64512
        %v318 = vsel %vm316, %v311, 0
        %v321 = vsel %vm316, %v312, 0
        %v324 = vsel %vm316, %v313, 0
        %v327 = vsel %vm316, %v314, 0
        %v330 = vsel %vm316, %v315, 0
        %332 = vmatprep.subr.mxu0 %v306
        %333 = vmatpush1.msra.mxu0 %v305
        %334 = vmatprep.subr.mxu0 0.0
        %335 = vmatpush1.msra.mxu0 0.0
        %336 = vmatprep.subr.mxu0 0.0
        %337 = vmatpush1.msra.mxu0 0.0
        %338 = vmatprep.subr.mxu0 0.0
        %339 = vmatpush1.msra.mxu0 0.0
        %340 = vmatprep.subr.mxu0 0.0
        %341 = vmatpush1.msra.mxu0 0.0
        %342 = vmatprep.subr.mxu0 0.0
        %343 = vmatpush1.msra.mxu0 0.0
        %344 = vmatprep.subr.mxu0 0.0
        %345 = vmatpush1.msra.mxu0 0.0
        %346 = vmatprep.subr.mxu0 0.0
        %347 = vmatpush1.msra.mxu0 0.0
        %348 = vmatprep.subr.mxu0 0.0
        %349 = vmatpush1.msra.mxu0 0.0
        %350 = vmatprep.subr.mxu0 0.0
        %351 = vmatpush1.msra.mxu0 0.0
        %352 = vmatprep.subr.mxu0 0.0
        %353 = vmatpush1.msra.mxu0 0.0
        %354 = vmatprep.subr.mxu0 0.0
        %355 = vmatpush1.msra.mxu0 0.0
        %356 = vmatprep.subr.mxu0 0.0
        %357 = vmatpush1.msra.mxu0 0.0
        %358 = vmatprep.subr.mxu0 0.0
        %359 = vmatpush1.msra.mxu0 0.0
        %360 = vmatprep.subr.mxu0 0.0
        %361 = vmatpush1.msra.mxu0 0.0
        %362 = vmatprep.subr.mxu0 0.0
        %363 = vmatpush1.msra.mxu0 0.0
        %364 = vmatprep.subr.mxu0 0.0
        %365 = vmatpush1.msra.mxu0 0.0
        %366 = vmatprep.subr.mxu0 0.0
        %367 = vmatpush1.msra.mxu0 0.0
        %368 = vmatprep.subr.mxu0 0.0
        %369 = vmatpush1.msra.mxu0 0.0
        %370 = vmatprep.subr.mxu0 0.0
        %371 = vmatpush1.msra.mxu0 0.0
        %372 = vmatprep.subr.mxu0 0.0
        %373 = vmatpush1.msra.mxu0 0.0
        %374 = vmatprep.subr.mxu0 0.0
        %375 = vmatpush1.msra.mxu0 0.0
        %376 = vmatprep.subr.mxu0 0.0
        %377 = vmatpush1.msra.mxu0 0.0
        %378 = vmatprep.subr.mxu0 0.0
        %379 = vmatpush1.msra.mxu0 0.0
        %380 = vmatprep.subr.mxu0 0.0
        %381 = vmatpush1.msra.mxu0 0.0
        %382 = vmatprep.subr.mxu0 0.0
        %383 = vmatpush1.msra.mxu0 0.0
        %384 = vmatprep.subr.mxu0 0.0
        %385 = vmatpush1.msra.mxu0 0.0
        %386 = vmatprep.subr.mxu0 0.0
        %387 = vmatpush1.msra.mxu0 0.0
        %388 = vmatprep.subr.mxu0 0.0
        %389 = vmatpush1.msra.mxu0 0.0
        %390 = vmatprep.subr.mxu0 0.0
        %391 = vmatpush1.msra.mxu0 0.0
        %392 = vmatprep.subr.mxu0 0.0
        %393 = vmatpush1.msra.mxu0 0.0
        %394 = vmatprep.subr.mxu0 0.0
        %395 = vmatpush1.msra.mxu0 0.0
        %396 = vmatprep.mubr.f32.mxu0 0.0
        %397 = vmatmul.mubr.f32.gmra.mrb[0].mxu0 %v318
        %v398 = vpop.f32.mrb[0].mxu0
        %v399 = vadd.f32 0.0, %v398
        %v400 = vpop.f32.mrb[0].mxu0
        %v401 = vadd.f32 0.0, %v400
        %402 = vmatprep.mubr.f32.mxu0 0.0
        %403 = vmatmul.mubr.f32.gmra.mrb[0].mxu0 %v321
        %v404 = vpop.f32.mrb[0].mxu0
        %v405 = vadd.f32 0.0, %v404
        %v406 = vpop.f32.mrb[0].mxu0
        %v407 = vadd.f32 0.0, %v406
        %408 = vmatprep.mubr.f32.mxu0 0.0
        %409 = vmatmul.mubr.f32.gmra.mrb[0].mxu0 %v324
        %v410 = vpop.f32.mrb[0].mxu0
        %v411 = vadd.f32 0.0, %v410
        %v412 = vpop.f32.mrb[0].mxu0
        %v413 = vadd.f32 0.0, %v412
        %414 = vmatprep.mubr.f32.mxu0 0.0
        %415 = vmatmul.mubr.f32.gmra.mrb[0].mxu0 %v327
        %v416 = vpop.f32.mrb[0].mxu0
        %v417 = vadd.f32 0.0, %v416
        %v418 = vpop.f32.mrb[0].mxu0
        %v419 = vadd.f32 0.0, %v418
        %420 = vmatprep.mubr.f32.mxu0 0.0
        %421 = vmatmul.mubr.f32.gmra.mrb[0].mxu0 %v330
        %v422 = vpop.f32.mrb[0].mxu0
        %v423 = vadd.f32 0.0, %v422
        %v424 = vpop.f32.mrb[0].mxu0
        %v425 = vadd.f32 0.0, %v424
        %426 = vdwg.mxu0
        %427 = vmatprep.subr.mxu0 %v308
        %428 = vmatpush1.msra.mxu0 %v307
        %429 = vmatprep.subr.mxu0 0.0
        %430 = vmatpush1.msra.mxu0 0.0
        %431 = vmatprep.subr.mxu0 0.0
        %432 = vmatpush1.msra.mxu0 0.0
        %433 = vmatprep.subr.mxu0 0.0
        %434 = vmatpush1.msra.mxu0 0.0
        %435 = vmatprep.subr.mxu0 0.0
        %436 = vmatpush1.msra.mxu0 0.0
        %437 = vmatprep.subr.mxu0 0.0
        %438 = vmatpush1.msra.mxu0 0.0
        %439 = vmatprep.subr.mxu0 0.0
        %440 = vmatpush1.msra.mxu0 0.0
        %441 = vmatprep.subr.mxu0 0.0
        %442 = vmatpush1.msra.mxu0 0.0
        %443 = vmatprep.subr.mxu0 0.0
        %444 = vmatpush1.msra.mxu0 0.0
        %445 = vmatprep.subr.mxu0 0.0
        %446 = vmatpush1.msra.mxu0 0.0
        %447 = vmatprep.subr.mxu0 0.0
        %448 = vmatpush1.msra.mxu0 0.0
        %449 = vmatprep.subr.mxu0 0.0
        %450 = vmatpush1.msra.mxu0 0.0
        %451 = vmatprep.subr.mxu0 0.0
        %452 = vmatpush1.msra.mxu0 0.0
        %453 = vmatprep.subr.mxu0 0.0
        %454 = vmatpush1.msra.mxu0 0.0
        %455 = vmatprep.subr.mxu0 0.0
        %456 = vmatpush1.msra.mxu0 0.0
        %457 = vmatprep.subr.mxu0 0.0
        %458 = vmatpush1.msra.mxu0 0.0
        %459 = vmatprep.subr.mxu0 0.0
        %460 = vmatpush1.msra.mxu0 0.0
        %461 = vmatprep.subr.mxu0 0.0
        %462 = vmatpush1.msra.mxu0 0.0
        %463 = vmatprep.subr.mxu0 0.0
        %464 = vmatpush1.msra.mxu0 0.0
        %465 = vmatprep.subr.mxu0 0.0
        %466 = vmatpush1.msra.mxu0 0.0
        %467 = vmatprep.subr.mxu0 0.0
        %468 = vmatpush1.msra.mxu0 0.0
        %469 = vmatprep.subr.mxu0 0.0
        %470 = vmatpush1.msra.mxu0 0.0
        %471 = vmatprep.subr.mxu0 0.0
        %472 = vmatpush1.msra.mxu0 0.0
        %473 = vmatprep.subr.mxu0 0.0
        %474 = vmatpush1.msra.mxu0 0.0
        %475 = vmatprep.subr.mxu0 0.0
        %476 = vmatpush1.msra.mxu0 0.0
        %477 = vmatprep.subr.mxu0 0.0
        %478 = vmatpush1.msra.mxu0 0.0
        %479 = vmatprep.subr.mxu0 0.0
        %480 = vmatpush1.msra.mxu0 0.0
        %481 = vmatprep.subr.mxu0 0.0
        %482 = vmatpush1.msra.mxu0 0.0
        %483 = vmatprep.subr.mxu0 0.0
        %484 = vmatpush1.msra.mxu0 0.0
        %485 = vmatprep.subr.mxu0 0.0
        %486 = vmatpush1.msra.mxu0 0.0
        %487 = vmatprep.subr.mxu0 0.0
        %488 = vmatpush1.msra.mxu0 0.0
        %489 = vmatprep.subr.mxu0 0.0
        %490 = vmatpush1.msra.mxu0 0.0
        %491 = vmatprep.mubr.f32.mxu0 0.0
        %492 = vmatmul.mubr.f32.gmra.mrb[0].mxu0 %v318
        %v493 = vpop.f32.mrb[0].mxu0
        %v494 = vadd.f32 0.0, %v493
        %v495 = vpop.f32.mrb[0].mxu0
        %v496 = vadd.f32 0.0, %v495
        %497 = vmatprep.mubr.f32.mxu0 0.0
        %498 = vmatmul.mubr.f32.gmra.mrb[0].mxu0 %v321
        %v499 = vpop.f32.mrb[0].mxu0
        %v500 = vadd.f32 0.0, %v499
        %v501 = vpop.f32.mrb[0].mxu0
        %v502 = vadd.f32 0.0, %v501
        %503 = vmatprep.mubr.f32.mxu0 0.0
        %504 = vmatmul.mubr.f32.gmra.mrb[0].mxu0 %v324
        %v505 = vpop.f32.mrb[0].mxu0
        %v506 = vadd.f32 0.0, %v505
        %v507 = vpop.f32.mrb[0].mxu0
        %v508 = vadd.f32 0.0, %v507
        %509 = vmatprep.mubr.f32.mxu0 0.0
        %510 = vmatmul.mubr.f32.gmra.mrb[0].mxu0 %v327
        %v511 = vpop.f32.mrb[0].mxu0
        %v512 = vadd.f32 0.0, %v511
        %v513 = vpop.f32.mrb[0].mxu0
        %v514 = vadd.f32 0.0, %v513
        %515 = vmatprep.mubr.f32.mxu0 0.0
        %516 = vmatmul.mubr.f32.gmra.mrb[0].mxu0 %v330
        %v517 = vpop.f32.mrb[0].mxu0
        %v518 = vadd.f32 0.0, %v517
        %v519 = vpop.f32.mrb[0].mxu0
        %v520 = vadd.f32 0.0, %v519
        %521 = vdwg.mxu0
        %522 = vmatprep.subr.mxu0 %v310
        %523 = vmatpush1.msra.mxu0 %v309
        %524 = vmatprep.subr.mxu0 0.0
        %525 = vmatpush1.msra.mxu0 0.0
        %526 = vmatprep.subr.mxu0 0.0
        %527 = vmatpush1.msra.mxu0 0.0
        %528 = vmatprep.subr.mxu0 0.0
        %529 = vmatpush1.msra.mxu0 0.0
        %530 = vmatprep.subr.mxu0 0.0
        %531 = vmatpush1.msra.mxu0 0.0
        %532 = vmatprep.subr.mxu0 0.0
        %533 = vmatpush1.msra.mxu0 0.0
        %534 = vmatprep.subr.mxu0 0.0
        %535 = vmatpush1.msra.mxu0 0.0
        %536 = vmatprep.subr.mxu0 0.0
        %537 = vmatpush1.msra.mxu0 0.0
        %538 = vmatprep.subr.mxu0 0.0
        %539 = vmatpush1.msra.mxu0 0.0
        %540 = vmatprep.subr.mxu0 0.0
        %541 = vmatpush1.msra.mxu0 0.0
        %542 = vmatprep.subr.mxu0 0.0
        %543 = vmatpush1.msra.mxu0 0.0
        %544 = vmatprep.subr.mxu0 0.0
        %545 = vmatpush1.msra.mxu0 0.0
        %546 = vmatprep.subr.mxu0 0.0
        %547 = vmatpush1.msra.mxu0 0.0
        %548 = vmatprep.subr.mxu0 0.0
        %549 = vmatpush1.msra.mxu0 0.0
        %550 = vmatprep.subr.mxu0 0.0
        %551 = vmatpush1.msra.mxu0 0.0
        %552 = vmatprep.subr.mxu0 0.0
        %553 = vmatpush1.msra.mxu0 0.0
        %554 = vmatprep.subr.mxu0 0.0
        %555 = vmatpush1.msra.mxu0 0.0
        %556 = vmatprep.subr.mxu0 0.0
        %557 = vmatpush1.msra.mxu0 0.0
        %558 = vmatprep.subr.mxu0 0.0
        %559 = vmatpush1.msra.mxu0 0.0
        %560 = vmatprep.subr.mxu0 0.0
        %561 = vmatpush1.msra.mxu0 0.0
        %562 = vmatprep.subr.mxu0 0.0
        %563 = vmatpush1.msra.mxu0 0.0
        %564 = vmatprep.subr.mxu0 0.0
        %565 = vmatpush1.msra.mxu0 0.0
        %566 = vmatprep.subr.mxu0 0.0
        %567 = vmatpush1.msra.mxu0 0.0
        %568 = vmatprep.subr.mxu0 0.0
        %569 = vmatpush1.msra.mxu0 0.0
        %570 = vmatprep.subr.mxu0 0.0
        %571 = vmatpush1.msra.mxu0 0.0
        %572 = vmatprep.subr.mxu0 0.0
        %573 = vmatpush1.msra.mxu0 0.0
        %574 = vmatprep.subr.mxu0 0.0
        %575 = vmatpush1.msra.mxu0 0.0
        %576 = vmatprep.subr.mxu0 0.0
        %577 = vmatpush1.msra.mxu0 0.0
        %578 = vmatprep.subr.mxu0 0.0
        %579 = vmatpush1.msra.mxu0 0.0
        %580 = vmatprep.subr.mxu0 0.0
        %581 = vmatpush1.msra.mxu0 0.0
        %582 = vmatprep.subr.mxu0 0.0
        %583 = vmatpush1.msra.mxu0 0.0
        %584 = vmatprep.subr.mxu0 0.0
        %585 = vmatpush1.msra.mxu0 0.0
        %586 = vmatprep.mubr.f32.mxu0 0.0
        %587 = vmatmul.mubr.f32.gmra.mrb[0].mxu0 %v318
        %v588 = vpop.f32.mrb[0].mxu0
        %v589 = vadd.f32 0.0, %v588
        %v590 = vpop.f32.mrb[0].mxu0
        %v591 = vadd.f32 0.0, %v590
        %592 = vmatprep.mubr.f32.mxu0 0.0
        %593 = vmatmul.mubr.f32.gmra.mrb[0].mxu0 %v321
        %v594 = vpop.f32.mrb[0].mxu0
        %v595 = vadd.f32 0.0, %v594
        %v596 = vpop.f32.mrb[0].mxu0
        %v597 = vadd.f32 0.0, %v596
        %598 = vmatprep.mubr.f32.mxu0 0.0
        %599 = vmatmul.mubr.f32.gmra.mrb[0].mxu0 %v324
        %v600 = vpop.f32.mrb[0].mxu0
        %v601 = vadd.f32 0.0, %v600
        %v602 = vpop.f32.mrb[0].mxu0
        %v603 = vadd.f32 0.0, %v602
        %604 = vmatprep.mubr.f32.mxu0 0.0
        %605 = vmatmul.mubr.f32.gmra.mrb[0].mxu0 %v327
        %v606 = vpop.f32.mrb[0].mxu0
        %v607 = vadd.f32 0.0, %v606
        %v608 = vpop.f32.mrb[0].mxu0
        %v609 = vadd.f32 0.0, %v608
        %610 = vmatprep.mubr.f32.mxu0 0.0
        %611 = vmatmul.mubr.f32.gmra.mrb[0].mxu0 %v330
        %v612 = vpop.f32.mrb[0].mxu0
        %v613 = vadd.f32 0.0, %v612
        %v614 = vpop.f32.mrb[0].mxu0
        %v615 = vadd.f32 0.0, %v614
        %616 = vdwg.mxu0
        %v617 = vld [vmem:[%s280] sm:$0xff]
        %v618 = vld [vmem:[%s280 + $0x8] sm:$0xff]
        %v619 = vld [vmem:[%s280 + $0x10] sm:$0xff]
        %v620 = vld [vmem:[%s280 + $0x18] sm:$0xff]
        %622 = vset.pattern.permute.xlu0 0
        %623 = vperm.xlu0 %622, %v617
        %v624 = vpop.permute.xlu0 %623
        %627 = vset.pattern.permute.xlu0 0
        %628 = vperm.xlu0 %627, %v618
        %v629 = vpop.permute.xlu0 %628
        %632 = vset.pattern.permute.xlu0 0
        %633 = vperm.xlu0 %632, %v619
        %v634 = vpop.permute.xlu0 %633
        %637 = vset.pattern.permute.xlu0 0
        %638 = vperm.xlu0 %637, %v620
        %v639 = vpop.permute.xlu0 %638
        %v641 = vadd.f32 %v399, %v624
        %v642 = vadd.f32 %v401, %v624
        %v643 = vadd.f32 %v494, %v624
        %v644 = vadd.f32 %v496, %v624
        %v645 = vadd.f32 %v589, %v624
        %v646 = vadd.f32 %v591, %v624
        %v647 = vadd.f32 %v405, %v629
        %v648 = vadd.f32 %v407, %v629
        %v649 = vadd.f32 %v500, %v629
        %v650 = vadd.f32 %v502, %v629
        %v651 = vadd.f32 %v595, %v629
        %v652 = vadd.f32 %v597, %v629
        %v653 = vadd.f32 %v411, %v634
        %v654 = vadd.f32 %v413, %v634
        %v655 = vadd.f32 %v506, %v634
        %v656 = vadd.f32 %v508, %v634
        %v657 = vadd.f32 %v601, %v634
        %v658 = vadd.f32 %v603, %v634
        %v659 = vadd.f32 %v417, %v639
        %v660 = vadd.f32 %v419, %v639
        %v661 = vadd.f32 %v512, %v639
        %v662 = vadd.f32 %v514, %v639
        %v663 = vadd.f32 %v607, %v639
        %v664 = vadd.f32 %v609, %v639
        %v665 = vxor.u32 %v641, 2147483648
        %v666 = vxor.u32 %v642, 2147483648
        %v667 = vxor.u32 %v643, 2147483648
        %v668 = vxor.u32 %v644, 2147483648
        %v669 = vxor.u32 %v645, 2147483648
        %v670 = vxor.u32 %v646, 2147483648
        %v671 = vxor.u32 %v647, 2147483648
        %v672 = vxor.u32 %v648, 2147483648
        %v673 = vxor.u32 %v649, 2147483648
        %v674 = vxor.u32 %v650, 2147483648
        %v675 = vxor.u32 %v651, 2147483648
        %v676 = vxor.u32 %v652, 2147483648
        %v677 = vxor.u32 %v653, 2147483648
        %v678 = vxor.u32 %v654, 2147483648
        %v679 = vxor.u32 %v655, 2147483648
        %v680 = vxor.u32 %v656, 2147483648
        %v681 = vxor.u32 %v657, 2147483648
        %v682 = vxor.u32 %v658, 2147483648
        %v683 = vxor.u32 %v659, 2147483648
        %v684 = vxor.u32 %v660, 2147483648
        %v685 = vxor.u32 %v661, 2147483648
        %v686 = vxor.u32 %v662, 2147483648
        %v687 = vxor.u32 %v663, 2147483648
        %v688 = vxor.u32 %v664, 2147483648
        %v689 = vmul.f32 %v665, 1.442695
        %v690 = vpow.pop %v689
        %v691 = vmul.f32 %v666, 1.442695
        %v692 = vpow.pop %v691
        %v693 = vmul.f32 %v667, 1.442695
        %v694 = vpow.pop %v693
        %v695 = vmul.f32 %v668, 1.442695
        %v696 = vpow.pop %v695
        %v697 = vmul.f32 %v669, 1.442695
        %v698 = vpow.pop %v697
        %v699 = vmul.f32 %v670, 1.442695
        %v700 = vpow.pop %v699
        %v701 = vmul.f32 %v671, 1.442695
        %v702 = vpow.pop %v701
        %v703 = vmul.f32 %v672, 1.442695
        %v704 = vpow.pop %v703
        %v705 = vmul.f32 %v673, 1.442695
        %v706 = vpow.pop %v705
        %v707 = vmul.f32 %v674, 1.442695
        %v708 = vpow.pop %v707
        %v709 = vmul.f32 %v675, 1.442695
        %v710 = vpow.pop %v709
        %v711 = vmul.f32 %v676, 1.442695
        %v712 = vpow.pop %v711
        %v713 = vmul.f32 %v677, 1.442695
        %v714 = vpow.pop %v713
        %v715 = vmul.f32 %v678, 1.442695
        %v716 = vpow.pop %v715
        %v717 = vmul.f32 %v679, 1.442695
        %v718 = vpow.pop %v717
        %v719 = vmul.f32 %v680, 1.442695
        %v720 = vpow.pop %v719
        %v721 = vmul.f32 %v681, 1.442695
        %v722 = vpow.pop %v721
        %v723 = vmul.f32 %v682, 1.442695
        %v724 = vpow.pop %v723
        %v725 = vmul.f32 %v683, 1.442695
        %v726 = vpow.pop %v725
        %v727 = vmul.f32 %v684, 1.442695
        %v728 = vpow.pop %v727
        %v729 = vmul.f32 %v685, 1.442695
        %v730 = vpow.pop %v729
        %v731 = vmul.f32 %v686, 1.442695
        %v732 = vpow.pop %v731
        %v733 = vmul.f32 %v687, 1.442695
        %v734 = vpow.pop %v733
        %v735 = vmul.f32 %v688, 1.442695
        %v736 = vpow.pop %v735
        %v737 = vadd.f32 %v690, 1.0
        %v738 = vadd.f32 %v692, 1.0
        %v739 = vadd.f32 %v694, 1.0
        %v740 = vadd.f32 %v696, 1.0
        %v741 = vadd.f32 %v698, 1.0
        %v742 = vadd.f32 %v700, 1.0
        %v743 = vadd.f32 %v702, 1.0
        %v744 = vadd.f32 %v704, 1.0
        %v745 = vadd.f32 %v706, 1.0
        %v746 = vadd.f32 %v708, 1.0
        %v747 = vadd.f32 %v710, 1.0
        %v748 = vadd.f32 %v712, 1.0
        %v749 = vadd.f32 %v714, 1.0
        %v750 = vadd.f32 %v716, 1.0
        %v751 = vadd.f32 %v718, 1.0
        %v752 = vadd.f32 %v720, 1.0
        %v753 = vadd.f32 %v722, 1.0
        %v754 = vadd.f32 %v724, 1.0
        %v755 = vadd.f32 %v726, 1.0
        %v756 = vadd.f32 %v728, 1.0
        %v757 = vadd.f32 %v730, 1.0
        %v758 = vadd.f32 %v732, 1.0
        %v759 = vadd.f32 %v734, 1.0
        %v760 = vadd.f32 %v736, 1.0
        %v761 = vrcp.pop %v737
        %v762 = vmul.f32 1.0, %v761
        %v763 = vrcp.pop %v738
        %v764 = vmul.f32 1.0, %v763
        %v765 = vrcp.pop %v739
        %v766 = vmul.f32 1.0, %v765
        %v767 = vrcp.pop %v740
        %v768 = vmul.f32 1.0, %v767
        %v769 = vrcp.pop %v741
        %v770 = vmul.f32 1.0, %v769
        %v771 = vrcp.pop %v742
        %v772 = vmul.f32 1.0, %v771
        %v773 = vrcp.pop %v743
        %v774 = vmul.f32 1.0, %v773
        %v775 = vrcp.pop %v744
        %v776 = vmul.f32 1.0, %v775
        %v777 = vrcp.pop %v745
        %v778 = vmul.f32 1.0, %v777
        %v779 = vrcp.pop %v746
        %v780 = vmul.f32 1.0, %v779
        %v781 = vrcp.pop %v747
        %v782 = vmul.f32 1.0, %v781
        %v783 = vrcp.pop %v748
        %v784 = vmul.f32 1.0, %v783
        %v785 = vrcp.pop %v749
        %v786 = vmul.f32 1.0, %v785
        %v787 = vrcp.pop %v750
        %v788 = vmul.f32 1.0, %v787
        %v789 = vrcp.pop %v751
        %v790 = vmul.f32 1.0, %v789
        %v791 = vrcp.pop %v752
        %v792 = vmul.f32 1.0, %v791
        %v793 = vrcp.pop %v753
        %v794 = vmul.f32 1.0, %v793
        %v795 = vrcp.pop %v754
        %v796 = vmul.f32 1.0, %v795
        %v797 = vrcp.pop %v755
        %v798 = vmul.f32 1.0, %v797
        %v799 = vrcp.pop %v756
        %v800 = vmul.f32 1.0, %v799
        %v801 = vrcp.pop %v757
        %v802 = vmul.f32 1.0, %v801
        %v803 = vrcp.pop %v758
        %v804 = vmul.f32 1.0, %v803
        %v805 = vrcp.pop %v759
        %v806 = vmul.f32 1.0, %v805
        %v807 = vrcp.pop %v760
        %v808 = vmul.f32 1.0, %v807
        %v809 = vmul.f32 %v641, %v762
        %v810 = vmul.f32 %v642, %v764
        %v811 = vmul.f32 %v643, %v766
        %v812 = vmul.f32 %v644, %v768
        %v813 = vmul.f32 %v645, %v770
        %v814 = vmul.f32 %v646, %v772
        %v815 = vmul.f32 %v647, %v774
        %v816 = vmul.f32 %v648, %v776
        %v817 = vmul.f32 %v649, %v778
        %v818 = vmul.f32 %v650, %v780
        %v819 = vmul.f32 %v651, %v782
        %v820 = vmul.f32 %v652, %v784
        %v821 = vmul.f32 %v653, %v786
        %v822 = vmul.f32 %v654, %v788
        %v823 = vmul.f32 %v655, %v790
        %v824 = vmul.f32 %v656, %v792
        %v825 = vmul.f32 %v657, %v794
        %v826 = vmul.f32 %v658, %v796
        %v827 = vmul.f32 %v659, %v798
        %v828 = vmul.f32 %v660, %v800
        %v829 = vmul.f32 %v661, %v802
        %v830 = vmul.f32 %v662, %v804
        %v831 = vmul.f32 %v663, %v806
        %v832 = vmul.f32 %v664, %v808
        %v833 = vld [vmem:[%s4] sm:$0xff]
        %v834 = vld [vmem:[%s5] sm:$0xff]
        %836 = vset.pattern.permute.xlu0 0
        %837 = vperm.xlu0 %836, %v834
        %v838 = vpop.permute.xlu0 %837
        %vm840 = vcmask 261120
        %v842 = vsel %vm840, %v833, 0
        %844 = vmatprep.subr.mxu0 %v810
        %845 = vmatpush1.msra.mxu0 %v809
        %846 = vmatprep.subr.mxu0 %v816
        %847 = vmatpush1.msra.mxu0 %v815
        %848 = vmatprep.subr.mxu0 %v822
        %849 = vmatpush1.msra.mxu0 %v821
        %850 = vmatprep.subr.mxu0 %v828
        %851 = vmatpush1.msra.mxu0 %v827
        %852 = vmatprep.subr.mxu0 0.0
        %853 = vmatpush1.msra.mxu0 0.0
        %854 = vmatprep.subr.mxu0 0.0
        %855 = vmatpush1.msra.mxu0 0.0
        %856 = vmatprep.subr.mxu0 0.0
        %857 = vmatpush1.msra.mxu0 0.0
        %858 = vmatprep.subr.mxu0 0.0
        %859 = vmatpush1.msra.mxu0 0.0
        %860 = vmatprep.subr.mxu0 0.0
        %861 = vmatpush1.msra.mxu0 0.0
        %862 = vmatprep.subr.mxu0 0.0
        %863 = vmatpush1.msra.mxu0 0.0
        %864 = vmatprep.subr.mxu0 0.0
        %865 = vmatpush1.msra.mxu0 0.0
        %866 = vmatprep.subr.mxu0 0.0
        %867 = vmatpush1.msra.mxu0 0.0
        %868 = vmatprep.subr.mxu0 0.0
        %869 = vmatpush1.msra.mxu0 0.0
        %870 = vmatprep.subr.mxu0 0.0
        %871 = vmatpush1.msra.mxu0 0.0
        %872 = vmatprep.subr.mxu0 0.0
        %873 = vmatpush1.msra.mxu0 0.0
        %874 = vmatprep.subr.mxu0 0.0
        %875 = vmatpush1.msra.mxu0 0.0
        %876 = vmatprep.subr.mxu0 0.0
        %877 = vmatpush1.msra.mxu0 0.0
        %878 = vmatprep.subr.mxu0 0.0
        %879 = vmatpush1.msra.mxu0 0.0
        %880 = vmatprep.subr.mxu0 0.0
        %881 = vmatpush1.msra.mxu0 0.0
        %882 = vmatprep.subr.mxu0 0.0
        %883 = vmatpush1.msra.mxu0 0.0
        %884 = vmatprep.subr.mxu0 0.0
        %885 = vmatpush1.msra.mxu0 0.0
        %886 = vmatprep.subr.mxu0 0.0
        %887 = vmatpush1.msra.mxu0 0.0
        %888 = vmatprep.subr.mxu0 0.0
        %889 = vmatpush1.msra.mxu0 0.0
        %890 = vmatprep.subr.mxu0 0.0
        %891 = vmatpush1.msra.mxu0 0.0
        %892 = vmatprep.subr.mxu0 0.0
        %893 = vmatpush1.msra.mxu0 0.0
        %894 = vmatprep.subr.mxu0 0.0
        %895 = vmatpush1.msra.mxu0 0.0
        %896 = vmatprep.subr.mxu0 0.0
        %897 = vmatpush1.msra.mxu0 0.0
        %898 = vmatprep.subr.mxu0 0.0
        %899 = vmatpush1.msra.mxu0 0.0
        %900 = vmatprep.subr.mxu0 0.0
        %901 = vmatpush1.msra.mxu0 0.0
        %902 = vmatprep.subr.mxu0 0.0
        %903 = vmatpush1.msra.mxu0 0.0
        %904 = vmatprep.subr.mxu0 0.0
        %905 = vmatpush1.msra.mxu0 0.0
        %906 = vmatprep.subr.mxu0 0.0
        %907 = vmatpush1.msra.mxu0 0.0
        %908 = vmatprep.mubr.f32.mxu0 0.0
        %909 = vmatmul.mubr.f32.gmra.mrb[0].mxu0 %v842
        %v910 = vpop.f32.mrb[0].mxu0
        %v911 = vadd.f32 %v838, %v910
        %v912 = vpop.f32.mrb[0].mxu0
        %v913 = vadd.f32 %v838, %v912
        %914 = vdwg.mxu0
        %915 = vmatprep.subr.mxu0 %v812
        %916 = vmatpush1.msra.mxu0 %v811
        %917 = vmatprep.subr.mxu0 %v818
        %918 = vmatpush1.msra.mxu0 %v817
        %919 = vmatprep.subr.mxu0 %v824
        %920 = vmatpush1.msra.mxu0 %v823
        %921 = vmatprep.subr.mxu0 %v830
        %922 = vmatpush1.msra.mxu0 %v829
        %923 = vmatprep.subr.mxu0 0.0
        %924 = vmatpush1.msra.mxu0 0.0
        %925 = vmatprep.subr.mxu0 0.0
        %926 = vmatpush1.msra.mxu0 0.0
        %927 = vmatprep.subr.mxu0 0.0
        %928 = vmatpush1.msra.mxu0 0.0
        %929 = vmatprep.subr.mxu0 0.0
        %930 = vmatpush1.msra.mxu0 0.0
        %931 = vmatprep.subr.mxu0 0.0
        %932 = vmatpush1.msra.mxu0 0.0
        %933 = vmatprep.subr.mxu0 0.0
        %934 = vmatpush1.msra.mxu0 0.0
        %935 = vmatprep.subr.mxu0 0.0
        %936 = vmatpush1.msra.mxu0 0.0
        %937 = vmatprep.subr.mxu0 0.0
        %938 = vmatpush1.msra.mxu0 0.0
        %939 = vmatprep.subr.mxu0 0.0
        %940 = vmatpush1.msra.mxu0 0.0
        %941 = vmatprep.subr.mxu0 0.0
        %942 = vmatpush1.msra.mxu0 0.0
        %943 = vmatprep.subr.mxu0 0.0
        %944 = vmatpush1.msra.mxu0 0.0
        %945 = vmatprep.subr.mxu0 0.0
        %946 = vmatpush1.msra.mxu0 0.0
        %947 = vmatprep.subr.mxu0 0.0
        %948 = vmatpush1.msra.mxu0 0.0
        %949 = vmatprep.subr.mxu0 0.0
        %950 = vmatpush1.msra.mxu0 0.0
        %951 = vmatprep.subr.mxu0 0.0
        %952 = vmatpush1.msra.mxu0 0.0
        %953 = vmatprep.subr.mxu0 0.0
        %954 = vmatpush1.msra.mxu0 0.0
        %955 = vmatprep.subr.mxu0 0.0
        %956 = vmatpush1.msra.mxu0 0.0
        %957 = vmatprep.subr.mxu0 0.0
        %958 = vmatpush1.msra.mxu0 0.0
        %959 = vmatprep.subr.mxu0 0.0
        %960 = vmatpush1.msra.mxu0 0.0
        %961 = vmatprep.subr.mxu0 0.0
        %962 = vmatpush1.msra.mxu0 0.0
        %963 = vmatprep.subr.mxu0 0.0
        %964 = vmatpush1.msra.mxu0 0.0
        %965 = vmatprep.subr.mxu0 0.0
        %966 = vmatpush1.msra.mxu0 0.0
        %967 = vmatprep.subr.mxu0 0.0
        %968 = vmatpush1.msra.mxu0 0.0
        %969 = vmatprep.subr.mxu0 0.0
        %970 = vmatpush1.msra.mxu0 0.0
        %971 = vmatprep.subr.mxu0 0.0
        %972 = vmatpush1.msra.mxu0 0.0
        %973 = vmatprep.subr.mxu0 0.0
        %974 = vmatpush1.msra.mxu0 0.0
        %975 = vmatprep.subr.mxu0 0.0
        %976 = vmatpush1.msra.mxu0 0.0
        %977 = vmatprep.subr.mxu0 0.0
        %978 = vmatpush1.msra.mxu0 0.0
        %979 = vmatprep.mubr.f32.mxu0 0.0
        %980 = vmatmul.mubr.f32.gmra.mrb[0].mxu0 %v842
        %v981 = vpop.f32.mrb[0].mxu0
        %v982 = vadd.f32 %v838, %v981
        %v983 = vpop.f32.mrb[0].mxu0
        %v984 = vadd.f32 %v838, %v983
        %985 = vdwg.mxu0
        %986 = vmatprep.subr.mxu0 %v814
        %987 = vmatpush1.msra.mxu0 %v813
        %988 = vmatprep.subr.mxu0 %v820
        %989 = vmatpush1.msra.mxu0 %v819
        %990 = vmatprep.subr.mxu0 %v826
        %991 = vmatpush1.msra.mxu0 %v825
        %992 = vmatprep.subr.mxu0 %v832
        %993 = vmatpush1.msra.mxu0 %v831
        %994 = vmatprep.subr.mxu0 0.0
        %995 = vmatpush1.msra.mxu0 0.0
        %996 = vmatprep.subr.mxu0 0.0
        %997 = vmatpush1.msra.mxu0 0.0
        %998 = vmatprep.subr.mxu0 0.0
        %999 = vmatpush1.msra.mxu0 0.0
        %1000 = vmatprep.subr.mxu0 0.0
        %1001 = vmatpush1.msra.mxu0 0.0
        %1002 = vmatprep.subr.mxu0 0.0
        %1003 = vmatpush1.msra.mxu0 0.0
        %1004 = vmatprep.subr.mxu0 0.0
        %1005 = vmatpush1.msra.mxu0 0.0
        %1006 = vmatprep.subr.mxu0 0.0
        %1007 = vmatpush1.msra.mxu0 0.0
        %1008 = vmatprep.subr.mxu0 0.0
        %1009 = vmatpush1.msra.mxu0 0.0
        %1010 = vmatprep.subr.mxu0 0.0
        %1011 = vmatpush1.msra.mxu0 0.0
        %1012 = vmatprep.subr.mxu0 0.0
        %1013 = vmatpush1.msra.mxu0 0.0
        %1014 = vmatprep.subr.mxu0 0.0
        %1015 = vmatpush1.msra.mxu0 0.0
        %1016 = vmatprep.subr.mxu0 0.0
        %1017 = vmatpush1.msra.mxu0 0.0
        %1018 = vmatprep.subr.mxu0 0.0
        %1019 = vmatpush1.msra.mxu0 0.0
        %1020 = vmatprep.subr.mxu0 0.0
        %1021 = vmatpush1.msra.mxu0 0.0
        %1022 = vmatprep.subr.mxu0 0.0
        %1023 = vmatpush1.msra.mxu0 0.0
        %1024 = vmatprep.subr.mxu0 0.0
        %1025 = vmatpush1.msra.mxu0 0.0
        %1026 = vmatprep.subr.mxu0 0.0
        %1027 = vmatpush1.msra.mxu0 0.0
        %1028 = vmatprep.subr.mxu0 0.0
        %1029 = vmatpush1.msra.mxu0 0.0
        %1030 = vmatprep.subr.mxu0 0.0
        %1031 = vmatpush1.msra.mxu0 0.0
        %1032 = vmatprep.subr.mxu0 0.0
        %1033 = vmatpush1.msra.mxu0 0.0
        %1034 = vmatprep.subr.mxu0 0.0
        %1035 = vmatpush1.msra.mxu0 0.0
        %1036 = vmatprep.subr.mxu0 0.0
        %1037 = vmatpush1.msra.mxu0 0.0
        %1038 = vmatprep.subr.mxu0 0.0
        %1039 = vmatpush1.msra.mxu0 0.0
        %1040 = vmatprep.subr.mxu0 0.0
        %1041 = vmatpush1.msra.mxu0 0.0
        %1042 = vmatprep.subr.mxu0 0.0
        %1043 = vmatpush1.msra.mxu0 0.0
        %1044 = vmatprep.subr.mxu0 0.0
        %1045 = vmatpush1.msra.mxu0 0.0
        %1046 = vmatprep.subr.mxu0 0.0
        %1047 = vmatpush1.msra.mxu0 0.0
        %1048 = vmatprep.subr.mxu0 0.0
        %1049 = vmatpush1.msra.mxu0 0.0
        %1050 = vmatprep.mubr.f32.mxu0 0.0
        %1051 = vmatmul.mubr.f32.gmra.mrb[0].mxu0 %v842
        %v1052 = vpop.f32.mrb[0].mxu0
        %v1053 = vadd.f32 %v838, %v1052
        %v1054 = vpop.f32.mrb[0].mxu0
        %v1055 = vadd.f32 %v838, %v1054
        %1056 = vdwg.mxu0
        %v1057 = vadd.f32 %v911, %v423
        %v1058 = vadd.f32 %v913, %v425
        %v1059 = vadd.f32 %v982, %v518
        %v1060 = vadd.f32 %v984, %v520
        %v1061 = vadd.f32 %v1053, %v613
        %v1062 = vadd.f32 %v1055, %v615
        %v1063 = vstv %s295
        %v1064 = vmul.f32 %v1063, %v298
        %v1065 = vmul.f32 %v1063, %v299
        %v1066 = vmul.f32 %v1063, %v300
        %v1067 = vmul.f32 %v1063, %v301
        %v1068 = vmul.f32 %v1063, %v302
        %v1069 = vmul.f32 %v1063, %v303
        %v1070 = vstv %s297
        %v1071 = vmul.f32 %v1070, %v1057
        %v1072 = vmul.f32 %v1070, %v1058
        %v1073 = vmul.f32 %v1070, %v1059
        %v1074 = vmul.f32 %v1070, %v1060
        %v1075 = vmul.f32 %v1070, %v1061
        %v1076 = vmul.f32 %v1070, %v1062
        %v1077 = vadd.f32 %v1064, %v1071
        %v1078 = vadd.f32 %v1065, %v1072
        %v1079 = vadd.f32 %v1066, %v1073
        %v1080 = vadd.f32 %v1067, %v1074
        %v1081 = vadd.f32 %v1068, %v1075
        %v1082 = vadd.f32 %v1069, %v1076
        %1083 = vst [vmem:[%s285] sm:$0xff] %v1077
        %1084 = vst [vmem:[%s285 + $0x8] sm:$0xff] %v1078
        %1085 = vst [vmem:[%s285 + $0x10] sm:$0xff] %v1079
        %1086 = vst [vmem:[%s285 + $0x18] sm:$0xff] %v1080
        %1087 = vst [vmem:[%s285 + $0x20] sm:$0xff] %v1081
        %1088 = vst [vmem:[%s285 + $0x28] sm:$0xff] %v1082
        %p1089 = scmp.lt.s32.totalorder %s18, 1
        %s1090 = scalar_select %p1089, %s18, 1
        %s1091 = smul.addr %s1090, 6
        %s1092 = smul.addr %s1091, 8
        %s1093 = scalar_lea.vmem %s6, %s1092
        // Predicated region
        $region49: #{triplane_diff_edm_forward.1} parent=43 // pred_check
          %p1094 = pneg %p172
        $region50: #{triplane_diff_edm_forward.1} parent=43 // pred_check_branch
          %1096 = sbr.rel (%p1094) target = $region52
        $region51: #{triplane_diff_edm_forward.1} parent=43 // pred_region
          _
        $region52: #{triplane_diff_edm_forward.1} parent=43 // pred_fallthru
          _
      $region44: #{triplane_diff_edm_forward.1} parent=5 // pred_fallthru
        _
      %p1097 = scmp.le.s32.totalorder 2, %s13
      // Predicated region
      $region53: #{triplane_diff_edm_forward.1} parent=5 // pred_check
        %p1098 = pneg %p1097
      $region54: #{triplane_diff_edm_forward.1} parent=5 // pred_check_branch
        %1100 = sbr.rel (%p1098) target = $region56
      $region55: #{triplane_diff_edm_forward.1} parent=5 // pred_region
        %s1101 = ssub.s32 %s13, 2
        // Predicated region
        $region57: #{triplane_diff_edm_forward.1} parent=55 // pred_check
          %p1102 = pneg %p178
        $region58: #{triplane_diff_edm_forward.1} parent=55 // pred_check_branch
          %1104 = sbr.rel (%p1102) target = $region60
        $region59: #{triplane_diff_edm_forward.1} parent=55 // pred_region
          %p1105 = scmp.lt.s32.totalorder %s19, 1
          %s1106 = scalar_select %p1105, %s19, 1
          %s1107 = smul.addr %s1106, 6
          %s1108 = smul.addr %s1107, 8
          %s1109 = scalar_lea.vmem %s6, %s1108
        $region60: #{triplane_diff_edm_forward.1} parent=55 // pred_fallthru
          _
      $region56: #{triplane_diff_edm_forward.1} parent=5 // pred_fallthru
        _
    $region6: #{triplane_diff_edm_forward.1} parent=1 // loop_footer
      %s17 = sadd.s32 1, %s13
    $region7: #{triplane_diff_edm_forward.1} parent=1 // loop_footer_branch
      %12 = sbr.rel target = $region3
    $region8: #{triplane_diff_edm_forward.1} parent=1 // loop_exit
      _
    %1110 = vsyncpa [#allocation3], 1
    %s1111 = scalar_lea.sflag [#allocation3], 1
    %1112 = vsyncpa %s1111, 1

</llo_original>
